<compile_context>
chip_gen: v6e
topology: v6e:2x2x1
jax: 0.10.0
libtpu: 0.0.40
codegen_flags: <defaults>
</compile_context>

<pallas_src>
import functools

import numpy as np
import jax
import jax.numpy as jnp
from jax import lax
from jax.experimental import pallas as pl
from jax.experimental.pallas import tpu as pltpu


# ---------------------------------------------------------------------------
# Fused BaseBlock kernel (one batch group per grid step, batch on lane axis)
# ---------------------------------------------------------------------------

def _fused_block_kernel(x_ref, w1_ref, w2_ref, w3_ref, b12_ref, b3_ref,
                        mask_ref, *rest, W, downsample, shortcut):
    # rest = ([sel_ref] if downsample) + [o_ref]
    if downsample:
        sel_ref, o_ref = rest
    else:
        (o_ref,) = rest
        sel_ref = None

    x = x_ref[...]                       # (Cin, L) f32, L = ips*HW, lane-dense
    b12 = b12_ref[...]                   # (c, 2)  -> bn1/bn2 shifts
    b1 = b12[:, 0:1]
    b2 = b12[:, 1:2]

    # ---- conv1: 1x1 expand on the MXU (BN1 scale already folded into w1) ----
    h = jnp.dot(w1_ref[...], x, preferred_element_type=jnp.float32)   # (c, L)
    h = jnp.clip(h + b1, 0.0, 6.0)                                    # bn1+relu6

    # ---- conv2: 3x3 depthwise via in-register lane rolls + 0/1 masks --------
    # Tap (kh,kw): input flat index = out index + delta, delta = (kh-1)*W+(kw-1).
    # pltpu.roll(h, shift=-delta)[i] = h[i+delta]; the precomputed per-tap mask
    # zeroes every position whose true tap falls outside its own image (this
    # also kills all roll wrap-around across image boundaries / array ends).
    w2 = w2_ref[...]                     # (c, 9), BN2 scale folded
    masks = mask_ref[...]                # (9, L)
    L = h.shape[1]

    acc = h * w2[:, 4:5]                 # center tap (delta = 0, mask all-ones)
    for kh in range(3):                  # statically unrolled 3x3 taps
        for kw in range(3):
            dh, dw = kh - 1, kw - 1
            if dh == 0 and dw == 0:
                continue
            t = kh * 3 + kw
            delta = dh * W + dw
            win = pltpu.roll(h, shift=(-delta) % L, axis=1)    # XLU rotate
            acc = acc + (win * masks[t:t + 1, :]) * w2[:, t:t + 1]

    if downsample:
        # Stride-2: select even spatial positions immediately after the
        # depthwise accumulation (block-diagonal 0/1 matrix, MXU), so the rest
        # of the block runs on HW/4 columns.
        acc = jnp.dot(acc, sel_ref[...], preferred_element_type=jnp.float32)

    h2 = jnp.clip(acc + b2, 0.0, 6.0)                                 # bn2+relu6

    # ---- conv3: 1x1 project on the MXU (BN3 scale folded into w3) -----------
    y = jnp.dot(w3_ref[...], h2, preferred_element_type=jnp.float32)  # (Cout, Lo)
    y = y + b3_ref[...]                                               # bn3 shift
    if shortcut:
        y = y + x                                                     # residual
    o_ref[...] = y.astype(o_ref.dtype)


# ---------------------------------------------------------------------------
# BaseBlock forward (wrapper): one fused pallas_call
# ---------------------------------------------------------------------------

@functools.partial(jax.jit, static_argnames=("downsample", "grid_steps"))
def base_block_forward(x_nchw, params, *, downsample, grid_steps=1):
    N, Cin, H, W = x_nchw.shape
    HW = H * W
    c = params["w1"].shape[0]
    Cout = params["w3"].shape[0]
    shortcut = (not downsample) and (Cin == Cout)
    Ho, Wo = ((H // 2, W // 2) if downsample else (H, W))
    HWo = Ho * Wo

    # Fold the whole batch (or N/grid_steps images per step) onto the lane axis.
    # NOTE: on v7x use grid_steps=2 (with N>=4, or no downsample) so both
    # TensorCores get a "parallel" step; on v5e/v6e a single step is best.
    assert N % grid_steps == 0
    ips = N // grid_steps
    L, Lo = ips * HW, ips * HWo

    # ---- fold BN scales into the conv weights (exact); shifts stay in-kernel
    w1 = (params["w1"] * params["s1"]).astype(jnp.float32)      # (c, Cin)
    w2 = (params["w2"] * params["s2"]).astype(jnp.float32)      # (c, 9)
    w3 = (params["w3"] * params["s3"]).astype(jnp.float32)      # (Cout, c)
    b12 = jnp.concatenate([params["b1"], params["b2"]], axis=1)  # (c, 2)
    b3 = params["b3"].astype(jnp.float32)                        # (Cout, 1)

    # NCHW -> channels-first with batch folded on lanes: (Cin, N*HW).
    x_cf = jnp.transpose(x_nchw.reshape(N, Cin, HW).astype(jnp.float32),
                         (1, 0, 2)).reshape(Cin, N * HW)

    # Per-tap 0/1 validity masks (baked as XLA constants under jit).
    ypos = np.arange(HW) // W
    xpos = np.arange(HW) % W
    tap_mask = np.zeros((9, HW), np.float32)
    for kh in range(3):
        for kw in range(3):
            dh, dw = kh - 1, kw - 1
            tap_mask[kh * 3 + kw] = ((ypos + dh >= 0) & (ypos + dh < H) &
                                     (xpos + dw >= 0) & (xpos + dw < W))
    tap_mask = np.tile(tap_mask, (1, ips))                        # (9, L)

    def const(shape):
        return pl.BlockSpec(shape, lambda g: (0,) * len(shape))

    in_specs = [
        pl.BlockSpec((Cin, L), lambda g: (0, g)),                 # x
        const((c, Cin)), const((c, 9)), const((Cout, c)),         # w1, w2, w3
        const((c, 2)), const((Cout, 1)),                          # b12, b3
        const((9, L)),                                            # tap masks
    ]
    inputs = [x_cf, w1, w2, w3, b12, b3, jnp.asarray(tap_mask)]

    if downsample:
        # Block-diagonal (per image) stride-2 selection matrix.
        # TODO(synk): replace with a strided select for real MobileNet shapes.
        sel_img = np.zeros((HW, HWo), np.float32)
        ho = np.arange(Ho)[:, None]
        wo = np.arange(Wo)[None, :]
        sel_img[((2 * ho) * W + 2 * wo).reshape(-1),
                (ho * Wo + wo).reshape(-1)] = 1.0
        sel = np.zeros((L, Lo), np.float32)
        for n in range(ips):
            sel[n * HW:(n + 1) * HW, n * HWo:(n + 1) * HWo] = sel_img
        in_specs.append(const((L, Lo)))
        inputs.append(jnp.asarray(sel))

    kernel = functools.partial(_fused_block_kernel, W=W,
                               downsample=downsample, shortcut=shortcut)
    out = pl.pallas_call(
        kernel,
        out_shape=jax.ShapeDtypeStruct((Cout, N * HWo), jnp.float32),
        grid=(grid_steps,),
        in_specs=in_specs,
        out_specs=pl.BlockSpec((Cout, Lo), lambda g: (0, g)),
        compiler_params=pltpu.CompilerParams(
            dimension_semantics=("parallel",)),
    )(*inputs)

    # (Cout, N*HWo) -> NCHW
    return jnp.transpose(out.reshape(Cout, N, HWo), (1, 0, 2)).reshape(
        N, Cout, Ho, Wo)


# ---------------------------------------------------------------------------
# Deterministic parameter construction (inference-mode BN folded)
# ---------------------------------------------------------------------------

def make_params(key, Cin, Cout, t=6):
    c = t * Cin
    ks = jax.random.split(key, 15)
    eps = 1e-5

    def bn_fold(kg, kb, km, kv, C):
        gamma = 0.5 + jax.random.uniform(kg, (C,), jnp.float32)
        beta = 0.1 * jax.random.normal(kb, (C,), jnp.float32)
        mean = 0.1 * jax.random.normal(km, (C,), jnp.float32)
        var = 0.5 + jax.random.uniform(kv, (C,), jnp.float32)
        scale = gamma / jnp.sqrt(var + eps)
        shift = beta - mean * scale
        return scale.reshape(C, 1), shift.reshape(C, 1)

    w1 = 0.2 * jax.random.normal(ks[0], (c, Cin), jnp.float32)     # 1x1 expand
    w2 = 0.2 * jax.random.normal(ks[1], (c, 9), jnp.float32)       # depthwise 3x3
    w3 = 0.2 * jax.random.normal(ks[2], (Cout, c), jnp.float32)    # 1x1 project
    s1, b1 = bn_fold(ks[3], ks[4], ks[5], ks[6], c)
    s2, b2 = bn_fold(ks[7], ks[8], ks[9], ks[10], c)
    s3, b3 = bn_fold(ks[11], ks[12], ks[13], ks[14], Cout)
    return {"w1": w1, "w2": w2, "w3": w3,
            "s1": s1, "b1": b1, "s2": s2, "b2": b2, "s3": s3, "b3": b3}


# ---------------------------------------------------------------------------
# Pure-JAX NCHW reference (for correctness check)
# ---------------------------------------------------------------------------

def ref_forward(x_nchw, params, *, downsample):
    N, Cin, H, W = x_nchw.shape
    c = params["w1"].shape[0]
    Cout = params["w3"].shape[0]
    stride = 2 if downsample else 1
    shortcut = (not downsample) and (Cin == Cout)
    dn = ("NCHW", "OIHW", "NCHW")

    w1 = params["w1"].reshape(c, Cin, 1, 1)
    w2 = params["w2"].reshape(c, 1, 3, 3)
    w3 = params["w3"].reshape(Cout, c, 1, 1)

    def bn(h, s, b):
        return h * s.reshape(1, -1, 1, 1) + b.reshape(1, -1, 1, 1)

    x = x_nchw.astype(jnp.float32)
    h = lax.conv_general_dilated(x, w1, (1, 1), "VALID", dimension_numbers=dn)
    h = jnp.clip(bn(h, params["s1"], params["b1"]), 0.0, 6.0)
    h = lax.conv_general_dilated(h, w2, (stride, stride), ((1, 1), (1, 1)),
                                 dimension_numbers=dn, feature_group_count=c)
    h = jnp.clip(bn(h, params["s2"], params["b2"]), 0.0, 6.0)
    h = lax.conv_general_dilated(h, w3, (1, 1), "VALID", dimension_numbers=dn)
    h = bn(h, params["s3"], params["b3"])
    if shortcut:
        h = h + x
    return h


if __name__ == "__main__":
    key = jax.random.PRNGKey(0)
    kx, kp1, kp2 = jax.random.split(key, 3)

    x = jax.random.normal(kx, (2, 4, 16, 16), jnp.float32)   # NCHW, like PyTorch

    # Case 1: BaseBlock(4, 4, t=6, downsample=False) -> identity shortcut path
    p1 = make_params(kp1, Cin=4, Cout=4, t=6)
    y1 = jax.block_until_ready(base_block_forward(x, p1, downsample=False))
    r1 = ref_forward(x, p1, downsample=False)
    np.testing.assert_allclose(np.asarray(y1), np.asarray(r1), rtol=5e-4, atol=5e-4)
    assert y1.shape == (2, 4, 16, 16)

    # Case 2: BaseBlock(4, 8, t=6, downsample=True) -> stride-2, no shortcut
    p2 = make_params(kp2, Cin=4, Cout=8, t=6)
    y2 = jax.block_until_ready(base_block_forward(x, p2, downsample=True))
    r2 = ref_forward(x, p2, downsample=True)
    np.testing.assert_allclose(np.asarray(y2), np.asarray(r2), rtol=5e-4, atol=5e-4)
    assert y2.shape == (2, 8, 8, 8)

    print("KERNEL_OK")
</pallas_src>

<mosaic_0001>
module attributes {stable_mosaic.version = 11 : i64} {
  func.func @_fused_block_kernel(%arg0: i32, %arg1: memref<4x512xf32, #tpu.memory_space<vmem>>, %arg2: memref<24x4xf32, #tpu.memory_space<vmem>>, %arg3: memref<24x9xf32, #tpu.memory_space<vmem>>, %arg4: memref<4x24xf32, #tpu.memory_space<vmem>>, %arg5: memref<24x2xf32, #tpu.memory_space<vmem>>, %arg6: memref<4x1xf32, #tpu.memory_space<vmem>>, %arg7: memref<9x512xf32, #tpu.memory_space<vmem>>, %arg8: memref<4x512xf32, #tpu.memory_space<vmem>>) attributes {dimension_semantics = [#tpu.dimension_semantics<parallel>], iteration_bounds = array<i64: 1>, scalar_prefetch = 0 : i64, scratch_operands = 0 : i64, tpu.core_type = #tpu.core_type<tc>, window_params = [{transform_indices = @transform_0, window_bounds = array<i64: 4, 512>}, {pipeline_mode = #tpu.pipeline_mode<synchronous>, transform_indices = @transform_1, window_bounds = array<i64: 24, 4>}, {pipeline_mode = #tpu.pipeline_mode<synchronous>, transform_indices = @transform_2, window_bounds = array<i64: 24, 9>}, {pipeline_mode = #tpu.pipeline_mode<synchronous>, transform_indices = @transform_3, window_bounds = array<i64: 4, 24>}, {pipeline_mode = #tpu.pipeline_mode<synchronous>, transform_indices = @transform_4, window_bounds = array<i64: 24, 2>}, {pipeline_mode = #tpu.pipeline_mode<synchronous>, transform_indices = @transform_5, window_bounds = array<i64: 4, 1>}, {pipeline_mode = #tpu.pipeline_mode<synchronous>, transform_indices = @transform_6, window_bounds = array<i64: 9, 512>}, {transform_indices = @transform_7, window_bounds = array<i64: 4, 512>}]} {
    %c0 = arith.constant 0 : index
    %c0_0 = arith.constant 0 : index
    %0 = vector.load %arg1[%c0, %c0_0] : memref<4x512xf32, #tpu.memory_space<vmem>>, vector<4x512xf32>
    %c0_1 = arith.constant 0 : index
    %c0_2 = arith.constant 0 : index
    %1 = vector.load %arg5[%c0_1, %c0_2] : memref<24x2xf32, #tpu.memory_space<vmem>>, vector<24x2xf32>
    %2 = vector.extract_strided_slice %1 {offsets = [0, 0], sizes = [24, 1], strides = [1, 1]} : vector<24x2xf32> to vector<24x1xf32>
    %3 = vector.extract_strided_slice %1 {offsets = [0, 1], sizes = [24, 1], strides = [1, 1]} : vector<24x2xf32> to vector<24x1xf32>
    %c0_3 = arith.constant 0 : index
    %c0_4 = arith.constant 0 : index
    %4 = vector.load %arg2[%c0_3, %c0_4] : memref<24x4xf32, #tpu.memory_space<vmem>>, vector<24x4xf32>
    %cst = arith.constant dense<0.000000e+00> : vector<24x512xf32>
    %5 = tpu.matmul %4, %0, %cst {dimension_numbers = #tpu.dot_dimension_numbers<[1], [0], [0], [1], [0, 0, 1, 1], [], []>} : vector<24x4xf32>, vector<4x512xf32>, vector<24x512xf32> -> vector<24x512xf32>
    %6 = vector.broadcast %2 : vector<24x1xf32> to vector<24x512xf32>
    %7 = arith.addf %5, %6 : vector<24x512xf32>
    %cst_5 = arith.constant 0.000000e+00 : f32
    %cst_6 = arith.constant 6.000000e+00 : f32
    %8 = vector.broadcast %cst_5 : f32 to vector<24x512xf32>
    %9 = arith.maximumf %8, %7 : vector<24x512xf32>
    %10 = vector.broadcast %cst_6 : f32 to vector<24x512xf32>
    %11 = arith.minimumf %10, %9 : vector<24x512xf32>
    %c0_7 = arith.constant 0 : index
    %c0_8 = arith.constant 0 : index
    %12 = vector.load %arg3[%c0_7, %c0_8] : memref<24x9xf32, #tpu.memory_space<vmem>>, vector<24x9xf32>
    %c0_9 = arith.constant 0 : index
    %c0_10 = arith.constant 0 : index
    %13 = vector.load %arg7[%c0_9, %c0_10] : memref<9x512xf32, #tpu.memory_space<vmem>>, vector<9x512xf32>
    %14 = vector.extract_strided_slice %12 {offsets = [0, 4], sizes = [24, 1], strides = [1, 1]} : vector<24x9xf32> to vector<24x1xf32>
    %15 = vector.broadcast %14 : vector<24x1xf32> to vector<24x512xf32>
    %16 = arith.mulf %11, %15 : vector<24x512xf32>
    %c17_i32 = arith.constant 17 : i32
    %17 = tpu.dynamic_rotate %11 by %c17_i32 dim 1 : vector<24x512xf32>, i32 -> vector<24x512xf32>
    %18 = vector.extract_strided_slice %13 {offsets = [0, 0], sizes = [1, 512], strides = [1, 1]} : vector<9x512xf32> to vector<1x512xf32>
    %19 = vector.broadcast %18 : vector<1x512xf32> to vector<24x512xf32>
    %20 = arith.mulf %17, %19 : vector<24x512xf32>
    %21 = vector.extract_strided_slice %12 {offsets = [0, 0], sizes = [24, 1], strides = [1, 1]} : vector<24x9xf32> to vector<24x1xf32>
    %22 = vector.broadcast %21 : vector<24x1xf32> to vector<24x512xf32>
    %23 = arith.mulf %20, %22 : vector<24x512xf32>
    %24 = arith.addf %16, %23 : vector<24x512xf32>
    %c16_i32 = arith.constant 16 : i32
    %25 = tpu.dynamic_rotate %11 by %c16_i32 dim 1 : vector<24x512xf32>, i32 -> vector<24x512xf32>
    %26 = vector.extract_strided_slice %13 {offsets = [1, 0], sizes = [1, 512], strides = [1, 1]} : vector<9x512xf32> to vector<1x512xf32>
    %27 = vector.broadcast %26 : vector<1x512xf32> to vector<24x512xf32>
    %28 = arith.mulf %25, %27 : vector<24x512xf32>
    %29 = vector.extract_strided_slice %12 {offsets = [0, 1], sizes = [24, 1], strides = [1, 1]} : vector<24x9xf32> to vector<24x1xf32>
    %30 = vector.broadcast %29 : vector<24x1xf32> to vector<24x512xf32>
    %31 = arith.mulf %28, %30 : vector<24x512xf32>
    %32 = arith.addf %24, %31 : vector<24x512xf32>
    %c15_i32 = arith.constant 15 : i32
    %33 = tpu.dynamic_rotate %11 by %c15_i32 dim 1 : vector<24x512xf32>, i32 -> vector<24x512xf32>
    %34 = vector.extract_strided_slice %13 {offsets = [2, 0], sizes = [1, 512], strides = [1, 1]} : vector<9x512xf32> to vector<1x512xf32>
    %35 = vector.broadcast %34 : vector<1x512xf32> to vector<24x512xf32>
    %36 = arith.mulf %33, %35 : vector<24x512xf32>
    %37 = vector.extract_strided_slice %12 {offsets = [0, 2], sizes = [24, 1], strides = [1, 1]} : vector<24x9xf32> to vector<24x1xf32>
    %38 = vector.broadcast %37 : vector<24x1xf32> to vector<24x512xf32>
    %39 = arith.mulf %36, %38 : vector<24x512xf32>
    %40 = arith.addf %32, %39 : vector<24x512xf32>
    %c1_i32 = arith.constant 1 : i32
    %41 = tpu.dynamic_rotate %11 by %c1_i32 dim 1 : vector<24x512xf32>, i32 -> vector<24x512xf32>
    %42 = vector.extract_strided_slice %13 {offsets = [3, 0], sizes = [1, 512], strides = [1, 1]} : vector<9x512xf32> to vector<1x512xf32>
    %43 = vector.broadcast %42 : vector<1x512xf32> to vector<24x512xf32>
    %44 = arith.mulf %41, %43 : vector<24x512xf32>
    %45 = vector.extract_strided_slice %12 {offsets = [0, 3], sizes = [24, 1], strides = [1, 1]} : vector<24x9xf32> to vector<24x1xf32>
    %46 = vector.broadcast %45 : vector<24x1xf32> to vector<24x512xf32>
    %47 = arith.mulf %44, %46 : vector<24x512xf32>
    %48 = arith.addf %40, %47 : vector<24x512xf32>
    %c511_i32 = arith.constant 511 : i32
    %49 = tpu.dynamic_rotate %11 by %c511_i32 dim 1 : vector<24x512xf32>, i32 -> vector<24x512xf32>
    %50 = vector.extract_strided_slice %13 {offsets = [5, 0], sizes = [1, 512], strides = [1, 1]} : vector<9x512xf32> to vector<1x512xf32>
    %51 = vector.broadcast %50 : vector<1x512xf32> to vector<24x512xf32>
    %52 = arith.mulf %49, %51 : vector<24x512xf32>
    %53 = vector.extract_strided_slice %12 {offsets = [0, 5], sizes = [24, 1], strides = [1, 1]} : vector<24x9xf32> to vector<24x1xf32>
    %54 = vector.broadcast %53 : vector<24x1xf32> to vector<24x512xf32>
    %55 = arith.mulf %52, %54 : vector<24x512xf32>
    %56 = arith.addf %48, %55 : vector<24x512xf32>
    %c497_i32 = arith.constant 497 : i32
    %57 = tpu.dynamic_rotate %11 by %c497_i32 dim 1 : vector<24x512xf32>, i32 -> vector<24x512xf32>
    %58 = vector.extract_strided_slice %13 {offsets = [6, 0], sizes = [1, 512], strides = [1, 1]} : vector<9x512xf32> to vector<1x512xf32>
    %59 = vector.broadcast %58 : vector<1x512xf32> to vector<24x512xf32>
    %60 = arith.mulf %57, %59 : vector<24x512xf32>
    %61 = vector.extract_strided_slice %12 {offsets = [0, 6], sizes = [24, 1], strides = [1, 1]} : vector<24x9xf32> to vector<24x1xf32>
    %62 = vector.broadcast %61 : vector<24x1xf32> to vector<24x512xf32>
    %63 = arith.mulf %60, %62 : vector<24x512xf32>
    %64 = arith.addf %56, %63 : vector<24x512xf32>
    %c496_i32 = arith.constant 496 : i32
    %65 = tpu.dynamic_rotate %11 by %c496_i32 dim 1 : vector<24x512xf32>, i32 -> vector<24x512xf32>
    %66 = vector.extract_strided_slice %13 {offsets = [7, 0], sizes = [1, 512], strides = [1, 1]} : vector<9x512xf32> to vector<1x512xf32>
    %67 = vector.broadcast %66 : vector<1x512xf32> to vector<24x512xf32>
    %68 = arith.mulf %65, %67 : vector<24x512xf32>
    %69 = vector.extract_strided_slice %12 {offsets = [0, 7], sizes = [24, 1], strides = [1, 1]} : vector<24x9xf32> to vector<24x1xf32>
    %70 = vector.broadcast %69 : vector<24x1xf32> to vector<24x512xf32>
    %71 = arith.mulf %68, %70 : vector<24x512xf32>
    %72 = arith.addf %64, %71 : vector<24x512xf32>
    %c495_i32 = arith.constant 495 : i32
    %73 = tpu.dynamic_rotate %11 by %c495_i32 dim 1 : vector<24x512xf32>, i32 -> vector<24x512xf32>
    %74 = vector.extract_strided_slice %13 {offsets = [8, 0], sizes = [1, 512], strides = [1, 1]} : vector<9x512xf32> to vector<1x512xf32>
    %75 = vector.broadcast %74 : vector<1x512xf32> to vector<24x512xf32>
    %76 = arith.mulf %73, %75 : vector<24x512xf32>
    %77 = vector.extract_strided_slice %12 {offsets = [0, 8], sizes = [24, 1], strides = [1, 1]} : vector<24x9xf32> to vector<24x1xf32>
    %78 = vector.broadcast %77 : vector<24x1xf32> to vector<24x512xf32>
    %79 = arith.mulf %76, %78 : vector<24x512xf32>
    %80 = arith.addf %72, %79 : vector<24x512xf32>
    %81 = vector.broadcast %3 : vector<24x1xf32> to vector<24x512xf32>
    %82 = arith.addf %80, %81 : vector<24x512xf32>
    %cst_11 = arith.constant 0.000000e+00 : f32
    %cst_12 = arith.constant 6.000000e+00 : f32
    %83 = vector.broadcast %cst_11 : f32 to vector<24x512xf32>
    %84 = arith.maximumf %83, %82 : vector<24x512xf32>
    %85 = vector.broadcast %cst_12 : f32 to vector<24x512xf32>
    %86 = arith.minimumf %85, %84 : vector<24x512xf32>
    %c0_13 = arith.constant 0 : index
    %c0_14 = arith.constant 0 : index
    %87 = vector.load %arg4[%c0_13, %c0_14] : memref<4x24xf32, #tpu.memory_space<vmem>>, vector<4x24xf32>
    %cst_15 = arith.constant dense<0.000000e+00> : vector<4x512xf32>
    %88 = tpu.matmul %87, %86, %cst_15 {dimension_numbers = #tpu.dot_dimension_numbers<[1], [0], [0], [1], [0, 0, 1, 1], [], []>} : vector<4x24xf32>, vector<24x512xf32>, vector<4x512xf32> -> vector<4x512xf32>
    %c0_16 = arith.constant 0 : index
    %c0_17 = arith.constant 0 : index
    %89 = vector.load %arg6[%c0_16, %c0_17] : memref<4x1xf32, #tpu.memory_space<vmem>>, vector<4x1xf32>
    %90 = vector.broadcast %89 : vector<4x1xf32> to vector<4x512xf32>
    %91 = arith.addf %88, %90 : vector<4x512xf32>
    %92 = arith.addf %91, %0 : vector<4x512xf32>
    %c0_18 = arith.constant 0 : index
    %c0_19 = arith.constant 0 : index
    %93 = vector.load %arg8[%c0_18, %c0_19] : memref<4x512xf32, #tpu.memory_space<vmem>>, vector<4x512xf32>
    tpu.vector_store %arg8[%c0_18, %c0_19], %92 {strides = array<i32>} : memref<4x512xf32, #tpu.memory_space<vmem>>, vector<4x512xf32>,
    return
  }
  func.func @transform_0(%arg0: i32) -> (i32, i32) {
    %c0_i32 = arith.constant 0 : i32
    %c0_i32_0 = arith.constant 0 : i32
    return %c0_i32, %arg0 : i32, i32
  }
  func.func @transform_1(%arg0: i32) -> (i32, i32) {
    %c0_i32 = arith.constant 0 : i32
    %c0_i32_0 = arith.constant 0 : i32
    %c0_i32_1 = arith.constant 0 : i32
    return %c0_i32, %c0_i32_0 : i32, i32
  }
  func.func @transform_2(%arg0: i32) -> (i32, i32) {
    %c0_i32 = arith.constant 0 : i32
    %c0_i32_0 = arith.constant 0 : i32
    %c0_i32_1 = arith.constant 0 : i32
    return %c0_i32, %c0_i32_0 : i32, i32
  }
  func.func @transform_3(%arg0: i32) -> (i32, i32) {
    %c0_i32 = arith.constant 0 : i32
    %c0_i32_0 = arith.constant 0 : i32
    %c0_i32_1 = arith.constant 0 : i32
    return %c0_i32, %c0_i32_0 : i32, i32
  }
  func.func @transform_4(%arg0: i32) -> (i32, i32) {
    %c0_i32 = arith.constant 0 : i32
    %c0_i32_0 = arith.constant 0 : i32
    %c0_i32_1 = arith.constant 0 : i32
    return %c0_i32, %c0_i32_0 : i32, i32
  }
  func.func @transform_5(%arg0: i32) -> (i32, i32) {
    %c0_i32 = arith.constant 0 : i32
    %c0_i32_0 = arith.constant 0 : i32
    %c0_i32_1 = arith.constant 0 : i32
    return %c0_i32, %c0_i32_0 : i32, i32
  }
  func.func @transform_6(%arg0: i32) -> (i32, i32) {
    %c0_i32 = arith.constant 0 : i32
    %c0_i32_0 = arith.constant 0 : i32
    %c0_i32_1 = arith.constant 0 : i32
    return %c0_i32, %c0_i32_0 : i32, i32
  }
  func.func @transform_7(%arg0: i32) -> (i32, i32) {
    %c0_i32 = arith.constant 0 : i32
    %c0_i32_0 = arith.constant 0 : i32
    return %c0_i32, %arg0 : i32, i32
  }
}

</mosaic_0001>

<llo_original>
// kernel: base_block_forward.1
$region0: #{base_block_forward.1}
  #allocation0 [shape = 'u32[]', space=smem, size = 0x4, offset = 0x4, fixed_abs, tag = 'smem constant byte address 0x4 - core index']
  #allocation1 [shape = 'u32[144,128]{1,0:T(1,128)}', space=vmem, size = 0x12000, scoped, tag = 'internal scratch']
  %s0 = inlined_call_operand.vmem [shape: f32[4,512], index: 0, kind: input, shape index: {}]
  %s1 = inlined_call_operand.vmem [shape: f32[24,4], index: 1, kind: input, shape index: {}]
  %s2 = inlined_call_operand.vmem [shape: f32[24,9], index: 2, kind: input, shape index: {}]
  %s3 = inlined_call_operand.vmem [shape: f32[4,24], index: 3, kind: input, shape index: {}]
  %s4 = inlined_call_operand.vmem [shape: f32[24,2], index: 4, kind: input, shape index: {}]
  %s5 = inlined_call_operand.vmem [shape: f32[4,1], index: 5, kind: input, shape index: {}]
  %s6 = inlined_call_operand.vmem [shape: f32[9,512], index: 6, kind: input, shape index: {}]
  %s7 = inlined_call_operand.vmem [shape: f32[4,512], index: 7, kind: output, shape index: {}]
  %s8 = sld [smem:[#allocation0]]
  $region38: #{base_block_forward.1} parent=0
    _
  %s10 = ssub.s32 1, %s8
  %s11 = scalar_select 0, %s10, %s8
  // Predicated region
  $region2: #{base_block_forward.1} parent=0 // pred_check
    _
  $region3: #{base_block_forward.1} parent=0 // pred_check_branch
    %13 = sbr.rel (0) target = $region5
  $region4: #{base_block_forward.1} parent=0 // pred_region
    _
  $region5: #{base_block_forward.1} parent=0 // pred_fallthru
    _
  // Predicated region
  $region6: #{base_block_forward.1} parent=0 // pred_check
    _
  $region7: #{base_block_forward.1} parent=0 // pred_check_branch
    %15 = sbr.rel (0) target = $region9
  $region8: #{base_block_forward.1} parent=0 // pred_region
    _
  $region9: #{base_block_forward.1} parent=0 // pred_fallthru
    _
  // Predicated region
  $region10: #{base_block_forward.1} parent=0 // pred_check
    _
  $region11: #{base_block_forward.1} parent=0 // pred_check_branch
    %17 = sbr.rel (0) target = $region13
  $region12: #{base_block_forward.1} parent=0 // pred_region
    _
  $region13: #{base_block_forward.1} parent=0 // pred_fallthru
    _
  // Predicated region
  $region14: #{base_block_forward.1} parent=0 // pred_check
    _
  $region15: #{base_block_forward.1} parent=0 // pred_check_branch
    %19 = sbr.rel (0) target = $region17
  $region16: #{base_block_forward.1} parent=0 // pred_region
    _
  $region17: #{base_block_forward.1} parent=0 // pred_fallthru
    _
  // Predicated region
  $region18: #{base_block_forward.1} parent=0 // pred_check
    _
  $region19: #{base_block_forward.1} parent=0 // pred_check_branch
    %21 = sbr.rel (0) target = $region21
  $region20: #{base_block_forward.1} parent=0 // pred_region
    _
  $region21: #{base_block_forward.1} parent=0 // pred_fallthru
    _
  // Predicated region
  $region22: #{base_block_forward.1} parent=0 // pred_check
    _
  $region23: #{base_block_forward.1} parent=0 // pred_check_branch
    %23 = sbr.rel (0) target = $region25
  $region24: #{base_block_forward.1} parent=0 // pred_region
    _
  $region25: #{base_block_forward.1} parent=0 // pred_fallthru
    _
  // Predicated region
  $region26: #{base_block_forward.1} parent=0 // pred_check
    _
  $region27: #{base_block_forward.1} parent=0 // pred_check_branch
    %25 = sbr.rel (0) target = $region29
  $region28: #{base_block_forward.1} parent=0 // pred_region
    _
  $region29: #{base_block_forward.1} parent=0 // pred_fallthru
    _
  %v26 = vld [vmem:[%s0] sm:$0xff]
  %v27 = vld [vmem:[%s0 + $0x8] sm:$0xff]
  %v28 = vld [vmem:[%s4] sm:$0xff]
  %v29 = vld [vmem:[%s4 + $0x8] sm:$0xff]
  %v30 = vld [vmem:[%s4 + $0x10] sm:$0xff]
  %v31 = vld [vmem:[%s1] sm:$0xff]
  %v32 = vld [vmem:[%s1 + $0x8] sm:$0xff]
  %v33 = vld [vmem:[%s1 + $0x10] sm:$0xff]
  %35 = vset.pattern.permute.xlu0 0
  %36 = vperm.xlu0 %35, %v28
  %v37 = vpop.permute.xlu0 %36
  %40 = vset.pattern.permute.xlu0 0
  %41 = vperm.xlu0 %40, %v29
  %v42 = vpop.permute.xlu0 %41
  %45 = vset.pattern.permute.xlu0 0
  %46 = vperm.xlu0 %45, %v30
  %v47 = vpop.permute.xlu0 %46
  %v51 = vcombine.high %v26, %v26
  %v52 = vcombine.high %v27, %v27
  %vm53 = vcmask 31744
  %v55 = vsel %vm53, %v31, 0
  %v58 = vsel %vm53, %v32, 0
  %v61 = vsel %vm53, %v33, 0
  %vm63 = vcmask 1043456
  %v64 = vsel %vm63, %v26, 0
  %v66 = vsel %vm63, %v51, 0
  %v68 = vsel %vm63, %v27, 0
  %v70 = vsel %vm63, %v52, 0
  %72 = vmatprep.subr.mxu0 0.0
  %73 = vmatpush1.msra.mxu0 0.0
  %74 = vmatprep.subr.mxu0 0.0
  %75 = vmatpush1.msra.mxu0 0.0
  %76 = vmatprep.subr.mxu0 0.0
  %77 = vmatpush1.msra.mxu0 0.0
  %78 = vmatprep.subr.mxu0 0.0
  %79 = vmatpush1.msra.mxu0 0.0
  %80 = vmatprep.subr.mxu0 0.0
  %81 = vmatpush1.msra.mxu0 0.0
  %82 = vmatprep.subr.mxu0 0.0
  %83 = vmatpush1.msra.mxu0 0.0
  %84 = vmatprep.subr.mxu0 0.0
  %85 = vmatpush1.msra.mxu0 0.0
  %86 = vmatprep.subr.mxu0 0.0
  %87 = vmatpush1.msra.mxu0 0.0
  %88 = vmatprep.subr.mxu0 0.0
  %89 = vmatpush1.msra.mxu0 0.0
  %90 = vmatprep.subr.mxu0 0.0
  %91 = vmatpush1.msra.mxu0 0.0
  %92 = vmatprep.subr.mxu0 0.0
  %93 = vmatpush1.msra.mxu0 0.0
  %94 = vmatprep.subr.mxu0 0.0
  %95 = vmatpush1.msra.mxu0 0.0
  %96 = vmatprep.subr.mxu0 0.0
  %97 = vmatpush1.msra.mxu0 0.0
  %98 = vmatprep.subr.mxu0 0.0
  %99 = vmatpush1.msra.mxu0 0.0
  %100 = vmatprep.subr.mxu0 0.0
  %101 = vmatpush1.msra.mxu0 0.0
  %102 = vmatprep.subr.mxu0 %v66
  %103 = vmatpush1.msra.mxu0 %v64
  %104 = vmatprep.subr.mxu0 0.0
  %105 = vmatpush2.msra.mxu0 0.0
  %106 = vmatprep.subr.mxu0 0.0
  %107 = vmatpush2.msra.mxu0 0.0
  %108 = vmatprep.subr.mxu0 0.0
  %109 = vmatpush2.msra.mxu0 0.0
  %110 = vmatprep.subr.mxu0 0.0
  %111 = vmatpush2.msra.mxu0 0.0
  %112 = vmatprep.subr.mxu0 0.0
  %113 = vmatpush2.msra.mxu0 0.0
  %114 = vmatprep.subr.mxu0 0.0
  %115 = vmatpush2.msra.mxu0 0.0
  %116 = vmatprep.subr.mxu0 0.0
  %117 = vmatpush2.msra.mxu0 0.0
  %118 = vmatprep.subr.mxu0 0.0
  %119 = vmatpush2.msra.mxu0 0.0
  %120 = vmatprep.subr.mxu0 0.0
  %121 = vmatpush2.msra.mxu0 0.0
  %122 = vmatprep.subr.mxu0 0.0
  %123 = vmatpush2.msra.mxu0 0.0
  %124 = vmatprep.subr.mxu0 0.0
  %125 = vmatpush2.msra.mxu0 0.0
  %126 = vmatprep.subr.mxu0 0.0
  %127 = vmatpush2.msra.mxu0 0.0
  %128 = vmatprep.subr.mxu0 0.0
  %129 = vmatpush2.msra.mxu0 0.0
  %130 = vmatprep.subr.mxu0 0.0
  %131 = vmatpush2.msra.mxu0 0.0
  %132 = vmatprep.subr.mxu0 0.0
  %133 = vmatpush2.msra.mxu0 0.0
  %134 = vmatprep.subr.mxu0 0.0
  %135 = vmatpush2.msra.mxu0 0.0
  %136 = vmatprep.mubr.f32.mxu0 0.0
  %137 = vmatmul.mubr.f32.gmra.mxu0 %v55
  %v138 = vpop.f32.mrf.mxu0
  %v139 = vadd.f32 %v37, %v138
  %v140 = vpop.f32.mrf.mxu0
  %v141 = vadd.f32 %v37, %v140
  %142 = vmatprep.mubr.f32.mxu0 0.0
  %143 = vmatmul.mubr.f32.gmra.mxu0 %v58
  %v144 = vpop.f32.mrf.mxu0
  %v145 = vadd.f32 %v42, %v144
  %v146 = vpop.f32.mrf.mxu0
  %v147 = vadd.f32 %v42, %v146
  %148 = vmatprep.mubr.f32.mxu0 0.0
  %149 = vmatmul.mubr.f32.gmra.mxu0 %v61
  %v150 = vpop.f32.mrf.mxu0
  %v151 = vadd.f32 %v47, %v150
  %v152 = vpop.f32.mrf.mxu0
  %v153 = vadd.f32 %v47, %v152
  %154 = vdwg.mxu0
  %155 = vmatprep.subr.mxu0 0.0
  %156 = vmatpush1.msra.mxu0 0.0
  %157 = vmatprep.subr.mxu0 0.0
  %158 = vmatpush1.msra.mxu0 0.0
  %159 = vmatprep.subr.mxu0 0.0
  %160 = vmatpush1.msra.mxu0 0.0
  %161 = vmatprep.subr.mxu0 0.0
  %162 = vmatpush1.msra.mxu0 0.0
  %163 = vmatprep.subr.mxu0 0.0
  %164 = vmatpush1.msra.mxu0 0.0
  %165 = vmatprep.subr.mxu0 0.0
  %166 = vmatpush1.msra.mxu0 0.0
  %167 = vmatprep.subr.mxu0 0.0
  %168 = vmatpush1.msra.mxu0 0.0
  %169 = vmatprep.subr.mxu0 0.0
  %170 = vmatpush1.msra.mxu0 0.0
  %171 = vmatprep.subr.mxu0 0.0
  %172 = vmatpush1.msra.mxu0 0.0
  %173 = vmatprep.subr.mxu0 0.0
  %174 = vmatpush1.msra.mxu0 0.0
  %175 = vmatprep.subr.mxu0 0.0
  %176 = vmatpush1.msra.mxu0 0.0
  %177 = vmatprep.subr.mxu0 0.0
  %178 = vmatpush1.msra.mxu0 0.0
  %179 = vmatprep.subr.mxu0 0.0
  %180 = vmatpush1.msra.mxu0 0.0
  %181 = vmatprep.subr.mxu0 0.0
  %182 = vmatpush1.msra.mxu0 0.0
  %183 = vmatprep.subr.mxu0 0.0
  %184 = vmatpush1.msra.mxu0 0.0
  %185 = vmatprep.subr.mxu0 %v70
  %186 = vmatpush1.msra.mxu0 %v68
  %187 = vmatprep.subr.mxu0 0.0
  %188 = vmatpush2.msra.mxu0 0.0
  %189 = vmatprep.subr.mxu0 0.0
  %190 = vmatpush2.msra.mxu0 0.0
  %191 = vmatprep.subr.mxu0 0.0
  %192 = vmatpush2.msra.mxu0 0.0
  %193 = vmatprep.subr.mxu0 0.0
  %194 = vmatpush2.msra.mxu0 0.0
  %195 = vmatprep.subr.mxu0 0.0
  %196 = vmatpush2.msra.mxu0 0.0
  %197 = vmatprep.subr.mxu0 0.0
  %198 = vmatpush2.msra.mxu0 0.0
  %199 = vmatprep.subr.mxu0 0.0
  %200 = vmatpush2.msra.mxu0 0.0
  %201 = vmatprep.subr.mxu0 0.0
  %202 = vmatpush2.msra.mxu0 0.0
  %203 = vmatprep.subr.mxu0 0.0
  %204 = vmatpush2.msra.mxu0 0.0
  %205 = vmatprep.subr.mxu0 0.0
  %206 = vmatpush2.msra.mxu0 0.0
  %207 = vmatprep.subr.mxu0 0.0
  %208 = vmatpush2.msra.mxu0 0.0
  %209 = vmatprep.subr.mxu0 0.0
  %210 = vmatpush2.msra.mxu0 0.0
  %211 = vmatprep.subr.mxu0 0.0
  %212 = vmatpush2.msra.mxu0 0.0
  %213 = vmatprep.subr.mxu0 0.0
  %214 = vmatpush2.msra.mxu0 0.0
  %215 = vmatprep.subr.mxu0 0.0
  %216 = vmatpush2.msra.mxu0 0.0
  %217 = vmatprep.subr.mxu0 0.0
  %218 = vmatpush2.msra.mxu0 0.0
  %219 = vmatprep.mubr.f32.mxu0 0.0
  %220 = vmatmul.mubr.f32.gmra.mxu0 %v55
  %v221 = vpop.f32.mrf.mxu0
  %v222 = vadd.f32 %v37, %v221
  %v223 = vpop.f32.mrf.mxu0
  %v224 = vadd.f32 %v37, %v223
  %225 = vmatprep.mubr.f32.mxu0 0.0
  %226 = vmatmul.mubr.f32.gmra.mxu0 %v58
  %v227 = vpop.f32.mrf.mxu0
  %v228 = vadd.f32 %v42, %v227
  %v229 = vpop.f32.mrf.mxu0
  %v230 = vadd.f32 %v42, %v229
  %231 = vmatprep.mubr.f32.mxu0 0.0
  %232 = vmatmul.mubr.f32.gmra.mxu0 %v61
  %v233 = vpop.f32.mrf.mxu0
  %v234 = vadd.f32 %v47, %v233
  %v235 = vpop.f32.mrf.mxu0
  %v236 = vadd.f32 %v47, %v235
  %237 = vdwg.mxu0
  %v238 = vmax.f32 %v139, 0.0
  %v239 = vmax.f32 %v141, 0.0
  %v240 = vmax.f32 %v222, 0.0
  %v241 = vmax.f32 %v224, 0.0
  %v242 = vmax.f32 %v145, 0.0
  %v243 = vmax.f32 %v147, 0.0
  %v244 = vmax.f32 %v228, 0.0
  %v245 = vmax.f32 %v230, 0.0
  %v246 = vmax.f32 %v151, 0.0
  %v247 = vmax.f32 %v153, 0.0
  %v248 = vmax.f32 %v234, 0.0
  %v249 = vmax.f32 %v236, 0.0
  %v250 = vmin.f32 %v238, 6.0
  %v251 = vmin.f32 %v239, 6.0
  %v252 = vmin.f32 %v240, 6.0
  %v253 = vmin.f32 %v241, 6.0
  %v254 = vmin.f32 %v242, 6.0
  %v255 = vmin.f32 %v243, 6.0
  %v256 = vmin.f32 %v244, 6.0
  %v257 = vmin.f32 %v245, 6.0
  %v258 = vmin.f32 %v246, 6.0
  %v259 = vmin.f32 %v247, 6.0
  %v260 = vmin.f32 %v248, 6.0
  %v261 = vmin.f32 %v249, 6.0
  %v262 = vld [vmem:[%s2] sm:$0xff]
  %v263 = vld [vmem:[%s2 + $0x8] sm:$0xff]
  %v264 = vld [vmem:[%s2 + $0x10] sm:$0xff]
  %v265 = vld [vmem:[%s6] sm:$0xff]
  %v266 = vld [vmem:[%s6 + $0x8] sm:$0xff]
  %v267 = vld [vmem:[%s6 + $0x10] sm:$0xff]
  %v268 = vld [vmem:[%s6 + $0x18] sm:$0xff]
  %v269 = vld [vmem:[%s6 + $0x20] sm:$0x1]
  %v270 = vld [vmem:[%s6 + $0x28] sm:$0x1]
  %v271 = vld [vmem:[%s6 + $0x30] sm:$0x1]
  %v272 = vld [vmem:[%s6 + $0x38] sm:$0x1]
  %274 = vset.pattern.permute.xlu0 4
  %275 = vperm.xlu0 %274, %v262
  %v276 = vpop.permute.xlu0 %275
  %279 = vset.pattern.permute.xlu0 4
  %280 = vperm.xlu0 %279, %v263
  %v281 = vpop.permute.xlu0 %280
  %284 = vset.pattern.permute.xlu0 4
  %285 = vperm.xlu0 %284, %v264
  %v286 = vpop.permute.xlu0 %285
  %v288 = vmul.f32 %v250, %v276
  %v289 = vmul.f32 %v251, %v276
  %v290 = vmul.f32 %v252, %v276
  %v291 = vmul.f32 %v253, %v276
  %v292 = vmul.f32 %v254, %v281
  %v293 = vmul.f32 %v255, %v281
  %v294 = vmul.f32 %v256, %v281
  %v295 = vmul.f32 %v257, %v281
  %v296 = vmul.f32 %v258, %v286
  %v297 = vmul.f32 %v259, %v286
  %v298 = vmul.f32 %v260, %v286
  %v299 = vmul.f32 %v261, %v286
  %300 = vrot.lane.b32.xlu0 %v250, 17
  %v301 = vpop.permute.xlu0 %300
  %302 = vrot.lane.b32.xlu0 %v254, 17
  %v303 = vpop.permute.xlu0 %302
  %304 = vrot.lane.b32.xlu0 %v258, 17
  %v305 = vpop.permute.xlu0 %304
  %306 = vrot.lane.b32.xlu0 %v251, 17
  %v307 = vpop.permute.xlu0 %306
  %308 = vrot.lane.b32.xlu0 %v255, 17
  %v309 = vpop.permute.xlu0 %308
  %310 = vrot.lane.b32.xlu0 %v259, 17
  %v311 = vpop.permute.xlu0 %310
  %312 = vrot.lane.b32.xlu0 %v252, 17
  %v313 = vpop.permute.xlu0 %312
  %314 = vrot.lane.b32.xlu0 %v256, 17
  %v315 = vpop.permute.xlu0 %314
  %316 = vrot.lane.b32.xlu0 %v260, 17
  %v317 = vpop.permute.xlu0 %316
  %318 = vrot.lane.b32.xlu0 %v253, 17
  %v319 = vpop.permute.xlu0 %318
  %320 = vrot.lane.b32.xlu0 %v257, 17
  %v321 = vpop.permute.xlu0 %320
  %322 = vrot.lane.b32.xlu0 %v261, 17
  %v323 = vpop.permute.xlu0 %322
  %v324 = vlaneseq
  %v325 = vand.u32 %v324, 127
  %vm326 = vcmp.lt.s32.totalorder %v325, 17
  %v327 = vsel %vm326, %v313, %v319
  %v328 = vsel %vm326, %v315, %v321
  %v329 = vsel %vm326, %v317, %v323
  %v330 = vsel %vm326, %v307, %v313
  %v331 = vsel %vm326, %v309, %v315
  %v332 = vsel %vm326, %v311, %v317
  %v333 = vsel %vm326, %v301, %v307
  %v334 = vsel %vm326, %v303, %v309
  %v335 = vsel %vm326, %v305, %v311
  %v336 = vsel %vm326, %v319, %v301
  %v337 = vsel %vm326, %v321, %v303
  %v338 = vsel %vm326, %v323, %v305
  %v339 = vlaneseq
  %v340 = vshrl.u32 %v339, 7
  %v341 = vsub.s32 0, %v340
  %v342 = vrot.slane %v265, %v341
  %v343 = vlaneseq
  %v344 = vshrl.u32 %v343, 7
  %v345 = vsub.s32 0, %v344
  %v346 = vrot.slane %v266, %v345
  %v347 = vlaneseq
  %v348 = vshrl.u32 %v347, 7
  %v349 = vsub.s32 0, %v348
  %v350 = vrot.slane %v267, %v349
  %v351 = vlaneseq
  %v352 = vshrl.u32 %v351, 7
  %v353 = vsub.s32 0, %v352
  %v354 = vrot.slane %v268, %v353
  %v355 = vmul.f32 %v336, %v342
  %v356 = vmul.f32 %v333, %v346
  %v357 = vmul.f32 %v330, %v350
  %v358 = vmul.f32 %v327, %v354
  %v359 = vmul.f32 %v337, %v342
  %v360 = vmul.f32 %v334, %v346
  %v361 = vmul.f32 %v331, %v350
  %v362 = vmul.f32 %v328, %v354
  %v363 = vmul.f32 %v338, %v342
  %v364 = vmul.f32 %v335, %v346
  %v365 = vmul.f32 %v332, %v350
  %v366 = vmul.f32 %v329, %v354
  %367 = vset.pattern.permute.xlu0 0
  %368 = vperm.xlu0 %367, %v262
  %v369 = vpop.permute.xlu0 %368
  %371 = vset.pattern.permute.xlu0 0
  %372 = vperm.xlu0 %371, %v263
  %v373 = vpop.permute.xlu0 %372
  %375 = vset.pattern.permute.xlu0 0
  %376 = vperm.xlu0 %375, %v264
  %v377 = vpop.permute.xlu0 %376
  %v379 = vmul.f32 %v355, %v369
  %v380 = vmul.f32 %v356, %v369
  %v381 = vmul.f32 %v357, %v369
  %v382 = vmul.f32 %v358, %v369
  %v383 = vmul.f32 %v359, %v373
  %v384 = vmul.f32 %v360, %v373
  %v385 = vmul.f32 %v361, %v373
  %v386 = vmul.f32 %v362, %v373
  %v387 = vmul.f32 %v363, %v377
  %v388 = vmul.f32 %v364, %v377
  %v389 = vmul.f32 %v365, %v377
  %v390 = vmul.f32 %v366, %v377
  %v391 = vadd.f32 %v288, %v379
  %v392 = vadd.f32 %v289, %v380
  %v393 = vadd.f32 %v290, %v381
  %v394 = vadd.f32 %v291, %v382
  %v395 = vadd.f32 %v292, %v383
  %v396 = vadd.f32 %v293, %v384
  %v397 = vadd.f32 %v294, %v385
  %v398 = vadd.f32 %v295, %v386
  %v399 = vadd.f32 %v296, %v387
  %v400 = vadd.f32 %v297, %v388
  %v401 = vadd.f32 %v298, %v389
  %v402 = vadd.f32 %v299, %v390
  %403 = vrot.lane.b32.xlu0 %v250, 16
  %v404 = vpop.permute.xlu0 %403
  %405 = vrot.lane.b32.xlu0 %v254, 16
  %v406 = vpop.permute.xlu0 %405
  %407 = vrot.lane.b32.xlu0 %v258, 16
  %v408 = vpop.permute.xlu0 %407
  %409 = vrot.lane.b32.xlu0 %v251, 16
  %v410 = vpop.permute.xlu0 %409
  %411 = vrot.lane.b32.xlu0 %v255, 16
  %v412 = vpop.permute.xlu0 %411
  %413 = vrot.lane.b32.xlu0 %v259, 16
  %v414 = vpop.permute.xlu0 %413
  %415 = vrot.lane.b32.xlu0 %v252, 16
  %v416 = vpop.permute.xlu0 %415
  %417 = vrot.lane.b32.xlu0 %v256, 16
  %v418 = vpop.permute.xlu0 %417
  %419 = vrot.lane.b32.xlu0 %v260, 16
  %v420 = vpop.permute.xlu0 %419
  %421 = vrot.lane.b32.xlu0 %v253, 16
  %v422 = vpop.permute.xlu0 %421
  %423 = vrot.lane.b32.xlu0 %v257, 16
  %v424 = vpop.permute.xlu0 %423
  %425 = vrot.lane.b32.xlu0 %v261, 16
  %v426 = vpop.permute.xlu0 %425
  %vm427 = vcmp.lt.s32.totalorder %v325, 16
  %v428 = vsel %vm427, %v416, %v422
  %v429 = vsel %vm427, %v418, %v424
  %v430 = vsel %vm427, %v420, %v426
  %v431 = vsel %vm427, %v410, %v416
  %v432 = vsel %vm427, %v412, %v418
  %v433 = vsel %vm427, %v414, %v420
  %v434 = vsel %vm427, %v404, %v410
  %v435 = vsel %vm427, %v406, %v412
  %v436 = vsel %vm427, %v408, %v414
  %v437 = vsel %vm427, %v422, %v404
  %v438 = vsel %vm427, %v424, %v406
  %v439 = vsel %vm427, %v426, %v408
  %v440 = vlaneseq
  %v441 = vshrl.u32 %v440, 7
  %v442 = vsub.s32 1, %v441
  %v443 = vrot.slane %v265, %v442
  %v444 = vlaneseq
  %v445 = vshrl.u32 %v444, 7
  %v446 = vsub.s32 1, %v445
  %v447 = vrot.slane %v266, %v446
  %v448 = vlaneseq
  %v449 = vshrl.u32 %v448, 7
  %v450 = vsub.s32 1, %v449
  %v451 = vrot.slane %v267, %v450
  %v452 = vlaneseq
  %v453 = vshrl.u32 %v452, 7
  %v454 = vsub.s32 1, %v453
  %v455 = vrot.slane %v268, %v454
  %v456 = vmul.f32 %v437, %v443
  %v457 = vmul.f32 %v434, %v447
  %v458 = vmul.f32 %v431, %v451
  %v459 = vmul.f32 %v428, %v455
  %v460 = vmul.f32 %v438, %v443
  %v461 = vmul.f32 %v435, %v447
  %v462 = vmul.f32 %v432, %v451
  %v463 = vmul.f32 %v429, %v455
  %v464 = vmul.f32 %v439, %v443
  %v465 = vmul.f32 %v436, %v447
  %v466 = vmul.f32 %v433, %v451
  %v467 = vmul.f32 %v430, %v455
  %468 = vset.pattern.permute.xlu0 1
  %469 = vperm.xlu0 %468, %v262
  %v470 = vpop.permute.xlu0 %469
  %472 = vset.pattern.permute.xlu0 1
  %473 = vperm.xlu0 %472, %v263
  %v474 = vpop.permute.xlu0 %473
  %476 = vset.pattern.permute.xlu0 1
  %477 = vperm.xlu0 %476, %v264
  %v478 = vpop.permute.xlu0 %477
  %v480 = vmul.f32 %v456, %v470
  %v481 = vmul.f32 %v457, %v470
  %v482 = vmul.f32 %v458, %v470
  %v483 = vmul.f32 %v459, %v470
  %v484 = vmul.f32 %v460, %v474
  %v485 = vmul.f32 %v461, %v474
  %v486 = vmul.f32 %v462, %v474
  %v487 = vmul.f32 %v463, %v474
  %v488 = vmul.f32 %v464, %v478
  %v489 = vmul.f32 %v465, %v478
  %v490 = vmul.f32 %v466, %v478
  %v491 = vmul.f32 %v467, %v478
  %v492 = vadd.f32 %v391, %v480
  %v493 = vadd.f32 %v392, %v481
  %v494 = vadd.f32 %v393, %v482
  %v495 = vadd.f32 %v394, %v483
  %v496 = vadd.f32 %v395, %v484
  %v497 = vadd.f32 %v396, %v485
  %v498 = vadd.f32 %v397, %v486
  %v499 = vadd.f32 %v398, %v487
  %v500 = vadd.f32 %v399, %v488
  %v501 = vadd.f32 %v400, %v489
  %v502 = vadd.f32 %v401, %v490
  %v503 = vadd.f32 %v402, %v491
  %504 = vrot.lane.b32.xlu0 %v250, 15
  %v505 = vpop.permute.xlu0 %504
  %506 = vrot.lane.b32.xlu0 %v254, 15
  %v507 = vpop.permute.xlu0 %506
  %508 = vrot.lane.b32.xlu0 %v258, 15
  %v509 = vpop.permute.xlu0 %508
  %510 = vrot.lane.b32.xlu0 %v251, 15
  %v511 = vpop.permute.xlu0 %510
  %512 = vrot.lane.b32.xlu0 %v255, 15
  %v513 = vpop.permute.xlu0 %512
  %514 = vrot.lane.b32.xlu0 %v259, 15
  %v515 = vpop.permute.xlu0 %514
  %516 = vrot.lane.b32.xlu0 %v252, 15
  %v517 = vpop.permute.xlu0 %516
  %518 = vrot.lane.b32.xlu0 %v256, 15
  %v519 = vpop.permute.xlu0 %518
  %520 = vrot.lane.b32.xlu0 %v260, 15
  %v521 = vpop.permute.xlu0 %520
  %522 = vrot.lane.b32.xlu0 %v253, 15
  %v523 = vpop.permute.xlu0 %522
  %524 = vrot.lane.b32.xlu0 %v257, 15
  %v525 = vpop.permute.xlu0 %524
  %526 = vrot.lane.b32.xlu0 %v261, 15
  %v527 = vpop.permute.xlu0 %526
  %vm528 = vcmp.lt.s32.totalorder %v325, 15
  %v529 = vsel %vm528, %v517, %v523
  %v530 = vsel %vm528, %v519, %v525
  %v531 = vsel %vm528, %v521, %v527
  %v532 = vsel %vm528, %v511, %v517
  %v533 = vsel %vm528, %v513, %v519
  %v534 = vsel %vm528, %v515, %v521
  %v535 = vsel %vm528, %v505, %v511
  %v536 = vsel %vm528, %v507, %v513
  %v537 = vsel %vm528, %v509, %v515
  %v538 = vsel %vm528, %v523, %v505
  %v539 = vsel %vm528, %v525, %v507
  %v540 = vsel %vm528, %v527, %v509
  %v541 = vlaneseq
  %v542 = vshrl.u32 %v541, 7
  %v543 = vsub.s32 2, %v542
  %v544 = vrot.slane %v265, %v543
  %v545 = vlaneseq
  %v546 = vshrl.u32 %v545, 7
  %v547 = vsub.s32 2, %v546
  %v548 = vrot.slane %v266, %v547
  %v549 = vlaneseq
  %v550 = vshrl.u32 %v549, 7
  %v551 = vsub.s32 2, %v550
  %v552 = vrot.slane %v267, %v551
  %v553 = vlaneseq
  %v554 = vshrl.u32 %v553, 7
  %v555 = vsub.s32 2, %v554
  %v556 = vrot.slane %v268, %v555
  %v557 = vmul.f32 %v538, %v544
  %v558 = vmul.f32 %v535, %v548
  %v559 = vmul.f32 %v532, %v552
  %v560 = vmul.f32 %v529, %v556
  %v561 = vmul.f32 %v539, %v544
  %v562 = vmul.f32 %v536, %v548
  %v563 = vmul.f32 %v533, %v552
  %v564 = vmul.f32 %v530, %v556
  %v565 = vmul.f32 %v540, %v544
  %v566 = vmul.f32 %v537, %v548
  %v567 = vmul.f32 %v534, %v552
  %v568 = vmul.f32 %v531, %v556
  %569 = vset.pattern.permute.xlu0 2
  %570 = vperm.xlu0 %569, %v262
  %v571 = vpop.permute.xlu0 %570
  %573 = vset.pattern.permute.xlu0 2
  %574 = vperm.xlu0 %573, %v263
  %v575 = vpop.permute.xlu0 %574
  %577 = vset.pattern.permute.xlu0 2
  %578 = vperm.xlu0 %577, %v264
  %v579 = vpop.permute.xlu0 %578
  %v581 = vmul.f32 %v557, %v571
  %v582 = vmul.f32 %v558, %v571
  %v583 = vmul.f32 %v559, %v571
  %v584 = vmul.f32 %v560, %v571
  %v585 = vmul.f32 %v561, %v575
  %v586 = vmul.f32 %v562, %v575
  %v587 = vmul.f32 %v563, %v575
  %v588 = vmul.f32 %v564, %v575
  %v589 = vmul.f32 %v565, %v579
  %v590 = vmul.f32 %v566, %v579
  %v591 = vmul.f32 %v567, %v579
  %v592 = vmul.f32 %v568, %v579
  %v593 = vadd.f32 %v492, %v581
  %v594 = vadd.f32 %v493, %v582
  %v595 = vadd.f32 %v494, %v583
  %v596 = vadd.f32 %v495, %v584
  %v597 = vadd.f32 %v496, %v585
  %v598 = vadd.f32 %v497, %v586
  %v599 = vadd.f32 %v498, %v587
  %v600 = vadd.f32 %v499, %v588
  %v601 = vadd.f32 %v500, %v589
  %v602 = vadd.f32 %v501, %v590
  %v603 = vadd.f32 %v502, %v591
  %v604 = vadd.f32 %v503, %v592
  %605 = vrot.lane.b32.xlu0 %v250, 1
  %v606 = vpop.permute.xlu0 %605
  %607 = vrot.lane.b32.xlu0 %v254, 1
  %v608 = vpop.permute.xlu0 %607
  %609 = vrot.lane.b32.xlu0 %v258, 1
  %v610 = vpop.permute.xlu0 %609
  %611 = vrot.lane.b32.xlu0 %v251, 1
  %v612 = vpop.permute.xlu0 %611
  %613 = vrot.lane.b32.xlu0 %v255, 1
  %v614 = vpop.permute.xlu0 %613
  %615 = vrot.lane.b32.xlu0 %v259, 1
  %v616 = vpop.permute.xlu0 %615
  %617 = vrot.lane.b32.xlu0 %v252, 1
  %v618 = vpop.permute.xlu0 %617
  %619 = vrot.lane.b32.xlu0 %v256, 1
  %v620 = vpop.permute.xlu0 %619
  %621 = vrot.lane.b32.xlu0 %v260, 1
  %v622 = vpop.permute.xlu0 %621
  %623 = vrot.lane.b32.xlu0 %v253, 1
  %v624 = vpop.permute.xlu0 %623
  %625 = vrot.lane.b32.xlu0 %v257, 1
  %v626 = vpop.permute.xlu0 %625
  %627 = vrot.lane.b32.xlu0 %v261, 1
  %v628 = vpop.permute.xlu0 %627
  %vm629 = vcmp.lt.s32.totalorder %v325, 1
  %v630 = vsel %vm629, %v618, %v624
  %v631 = vsel %vm629, %v620, %v626
  %v632 = vsel %vm629, %v622, %v628
  %v633 = vsel %vm629, %v612, %v618
  %v634 = vsel %vm629, %v614, %v620
  %v635 = vsel %vm629, %v616, %v622
  %v636 = vsel %vm629, %v606, %v612
  %v637 = vsel %vm629, %v608, %v614
  %v638 = vsel %vm629, %v610, %v616
  %v639 = vsel %vm629, %v624, %v606
  %v640 = vsel %vm629, %v626, %v608
  %v641 = vsel %vm629, %v628, %v610
  %v642 = vlaneseq
  %v643 = vshrl.u32 %v642, 7
  %v644 = vsub.s32 3, %v643
  %v645 = vrot.slane %v265, %v644
  %v646 = vlaneseq
  %v647 = vshrl.u32 %v646, 7
  %v648 = vsub.s32 3, %v647
  %v649 = vrot.slane %v266, %v648
  %v650 = vlaneseq
  %v651 = vshrl.u32 %v650, 7
  %v652 = vsub.s32 3, %v651
  %v653 = vrot.slane %v267, %v652
  %v654 = vlaneseq
  %v655 = vshrl.u32 %v654, 7
  %v656 = vsub.s32 3, %v655
  %v657 = vrot.slane %v268, %v656
  %v658 = vmul.f32 %v639, %v645
  %v659 = vmul.f32 %v636, %v649
  %v660 = vmul.f32 %v633, %v653
  %v661 = vmul.f32 %v630, %v657
  %v662 = vmul.f32 %v640, %v645
  %v663 = vmul.f32 %v637, %v649
  %v664 = vmul.f32 %v634, %v653
  %v665 = vmul.f32 %v631, %v657
  %v666 = vmul.f32 %v641, %v645
  %v667 = vmul.f32 %v638, %v649
  %v668 = vmul.f32 %v635, %v653
  %v669 = vmul.f32 %v632, %v657
  %670 = vset.pattern.permute.xlu0 3
  %671 = vperm.xlu0 %670, %v262
  %v672 = vpop.permute.xlu0 %671
  %674 = vset.pattern.permute.xlu0 3
  %675 = vperm.xlu0 %674, %v263
  %v676 = vpop.permute.xlu0 %675
  %678 = vset.pattern.permute.xlu0 3
  %679 = vperm.xlu0 %678, %v264
  %v680 = vpop.permute.xlu0 %679
  %v682 = vmul.f32 %v658, %v672
  %v683 = vmul.f32 %v659, %v672
  %v684 = vmul.f32 %v660, %v672
  %v685 = vmul.f32 %v661, %v672
  %v686 = vmul.f32 %v662, %v676
  %v687 = vmul.f32 %v663, %v676
  %v688 = vmul.f32 %v664, %v676
  %v689 = vmul.f32 %v665, %v676
  %v690 = vmul.f32 %v666, %v680
  %v691 = vmul.f32 %v667, %v680
  %v692 = vmul.f32 %v668, %v680
  %v693 = vmul.f32 %v669, %v680
  %v694 = vadd.f32 %v593, %v682
  %v695 = vadd.f32 %v594, %v683
  %v696 = vadd.f32 %v595, %v684
  %v697 = vadd.f32 %v596, %v685
  %v698 = vadd.f32 %v597, %v686
  %v699 = vadd.f32 %v598, %v687
  %v700 = vadd.f32 %v599, %v688
  %v701 = vadd.f32 %v600, %v689
  %v702 = vadd.f32 %v601, %v690
  %v703 = vadd.f32 %v602, %v691
  %v704 = vadd.f32 %v603, %v692
  %v705 = vadd.f32 %v604, %v693
  %706 = vrot.lane.b32.xlu0 %v250, 127
  %v707 = vpop.permute.xlu0 %706
  %708 = vrot.lane.b32.xlu0 %v254, 127
  %v709 = vpop.permute.xlu0 %708
  %710 = vrot.lane.b32.xlu0 %v258, 127
  %v711 = vpop.permute.xlu0 %710
  %712 = vrot.lane.b32.xlu0 %v251, 127
  %v713 = vpop.permute.xlu0 %712
  %714 = vrot.lane.b32.xlu0 %v255, 127
  %v715 = vpop.permute.xlu0 %714
  %716 = vrot.lane.b32.xlu0 %v259, 127
  %v717 = vpop.permute.xlu0 %716
  %718 = vrot.lane.b32.xlu0 %v252, 127
  %v719 = vpop.permute.xlu0 %718
  %720 = vrot.lane.b32.xlu0 %v256, 127
  %v721 = vpop.permute.xlu0 %720
  %722 = vrot.lane.b32.xlu0 %v260, 127
  %v723 = vpop.permute.xlu0 %722
  %724 = vrot.lane.b32.xlu0 %v253, 127
  %v725 = vpop.permute.xlu0 %724
  %726 = vrot.lane.b32.xlu0 %v257, 127
  %v727 = vpop.permute.xlu0 %726
  %728 = vrot.lane.b32.xlu0 %v261, 127
  %v729 = vpop.permute.xlu0 %728
  %vm730 = vcmp.lt.s32.totalorder %v325, 127
  %v731 = vsel %vm730, %v719, %v725
  %v732 = vsel %vm730, %v721, %v727
  %v733 = vsel %vm730, %v723, %v729
  %v734 = vsel %vm730, %v713, %v719
  %v735 = vsel %vm730, %v715, %v721
  %v736 = vsel %vm730, %v717, %v723
  %v737 = vsel %vm730, %v707, %v713
  %v738 = vsel %vm730, %v709, %v715
  %v739 = vsel %vm730, %v711, %v717
  %v740 = vsel %vm730, %v725, %v707
  %v741 = vsel %vm730, %v727, %v709
  %v742 = vsel %vm730, %v729, %v711
  %v743 = vlaneseq
  %v744 = vshrl.u32 %v743, 7
  %v745 = vsub.s32 5, %v744
  %v746 = vrot.slane %v265, %v745
  %v747 = vlaneseq
  %v748 = vshrl.u32 %v747, 7
  %v749 = vsub.s32 5, %v748
  %v750 = vrot.slane %v266, %v749
  %v751 = vlaneseq
  %v752 = vshrl.u32 %v751, 7
  %v753 = vsub.s32 5, %v752
  %v754 = vrot.slane %v267, %v753
  %v755 = vlaneseq
  %v756 = vshrl.u32 %v755, 7
  %v757 = vsub.s32 5, %v756
  %v758 = vrot.slane %v268, %v757
  %v759 = vmul.f32 %v737, %v746
  %v760 = vmul.f32 %v734, %v750
  %v761 = vmul.f32 %v731, %v754
  %v762 = vmul.f32 %v740, %v758
  %v763 = vmul.f32 %v738, %v746
  %v764 = vmul.f32 %v735, %v750
  %v765 = vmul.f32 %v732, %v754
  %v766 = vmul.f32 %v741, %v758
  %v767 = vmul.f32 %v739, %v746
  %v768 = vmul.f32 %v736, %v750
  %v769 = vmul.f32 %v733, %v754
  %v770 = vmul.f32 %v742, %v758
  %771 = vset.pattern.permute.xlu0 5
  %772 = vperm.xlu0 %771, %v262
  %v773 = vpop.permute.xlu0 %772
  %775 = vset.pattern.permute.xlu0 5
  %776 = vperm.xlu0 %775, %v263
  %v777 = vpop.permute.xlu0 %776
  %779 = vset.pattern.permute.xlu0 5
  %780 = vperm.xlu0 %779, %v264
  %v781 = vpop.permute.xlu0 %780
  %v783 = vmul.f32 %v759, %v773
  %v784 = vmul.f32 %v760, %v773
  %v785 = vmul.f32 %v761, %v773
  %v786 = vmul.f32 %v762, %v773
  %v787 = vmul.f32 %v763, %v777
  %v788 = vmul.f32 %v764, %v777
  %v789 = vmul.f32 %v765, %v777
  %v790 = vmul.f32 %v766, %v777
  %v791 = vmul.f32 %v767, %v781
  %v792 = vmul.f32 %v768, %v781
  %v793 = vmul.f32 %v769, %v781
  %v794 = vmul.f32 %v770, %v781
  %v795 = vadd.f32 %v694, %v783
  %v796 = vadd.f32 %v695, %v784
  %v797 = vadd.f32 %v696, %v785
  %v798 = vadd.f32 %v697, %v786
  %v799 = vadd.f32 %v698, %v787
  %v800 = vadd.f32 %v699, %v788
  %v801 = vadd.f32 %v700, %v789
  %v802 = vadd.f32 %v701, %v790
  %v803 = vadd.f32 %v702, %v791
  %v804 = vadd.f32 %v703, %v792
  %v805 = vadd.f32 %v704, %v793
  %v806 = vadd.f32 %v705, %v794
  %807 = vrot.lane.b32.xlu0 %v250, 113
  %v808 = vpop.permute.xlu0 %807
  %809 = vrot.lane.b32.xlu0 %v254, 113
  %v810 = vpop.permute.xlu0 %809
  %811 = vrot.lane.b32.xlu0 %v258, 113
  %v812 = vpop.permute.xlu0 %811
  %813 = vrot.lane.b32.xlu0 %v251, 113
  %v814 = vpop.permute.xlu0 %813
  %815 = vrot.lane.b32.xlu0 %v255, 113
  %v816 = vpop.permute.xlu0 %815
  %817 = vrot.lane.b32.xlu0 %v259, 113
  %v818 = vpop.permute.xlu0 %817
  %819 = vrot.lane.b32.xlu0 %v252, 113
  %v820 = vpop.permute.xlu0 %819
  %821 = vrot.lane.b32.xlu0 %v256, 113
  %v822 = vpop.permute.xlu0 %821
  %823 = vrot.lane.b32.xlu0 %v260, 113
  %v824 = vpop.permute.xlu0 %823
  %825 = vrot.lane.b32.xlu0 %v253, 113
  %v826 = vpop.permute.xlu0 %825
  %827 = vrot.lane.b32.xlu0 %v257, 113
  %v828 = vpop.permute.xlu0 %827
  %829 = vrot.lane.b32.xlu0 %v261, 113
  %v830 = vpop.permute.xlu0 %829
  %vm831 = vcmp.lt.s32.totalorder %v325, 113
  %v832 = vsel %vm831, %v820, %v826
  %v833 = vsel %vm831, %v822, %v828
  %v834 = vsel %vm831, %v824, %v830
  %v835 = vsel %vm831, %v814, %v820
  %v836 = vsel %vm831, %v816, %v822
  %v837 = vsel %vm831, %v818, %v824
  %v838 = vsel %vm831, %v808, %v814
  %v839 = vsel %vm831, %v810, %v816
  %v840 = vsel %vm831, %v812, %v818
  %v841 = vsel %vm831, %v826, %v808
  %v842 = vsel %vm831, %v828, %v810
  %v843 = vsel %vm831, %v830, %v812
  %v844 = vlaneseq
  %v845 = vshrl.u32 %v844, 7
  %v846 = vsub.s32 6, %v845
  %v847 = vrot.slane %v265, %v846
  %v848 = vlaneseq
  %v849 = vshrl.u32 %v848, 7
  %v850 = vsub.s32 6, %v849
  %v851 = vrot.slane %v266, %v850
  %v852 = vlaneseq
  %v853 = vshrl.u32 %v852, 7
  %v854 = vsub.s32 6, %v853
  %v855 = vrot.slane %v267, %v854
  %v856 = vlaneseq
  %v857 = vshrl.u32 %v856, 7
  %v858 = vsub.s32 6, %v857
  %v859 = vrot.slane %v268, %v858
  %v860 = vmul.f32 %v838, %v847
  %v861 = vmul.f32 %v835, %v851
  %v862 = vmul.f32 %v832, %v855
  %v863 = vmul.f32 %v841, %v859
  %v864 = vmul.f32 %v839, %v847
  %v865 = vmul.f32 %v836, %v851
  %v866 = vmul.f32 %v833, %v855
  %v867 = vmul.f32 %v842, %v859
  %v868 = vmul.f32 %v840, %v847
  %v869 = vmul.f32 %v837, %v851
  %v870 = vmul.f32 %v834, %v855
  %v871 = vmul.f32 %v843, %v859
  %872 = vset.pattern.permute.xlu0 6
  %873 = vperm.xlu0 %872, %v262
  %v874 = vpop.permute.xlu0 %873
  %876 = vset.pattern.permute.xlu0 6
  %877 = vperm.xlu0 %876, %v263
  %v878 = vpop.permute.xlu0 %877
  %880 = vset.pattern.permute.xlu0 6
  %881 = vperm.xlu0 %880, %v264
  %v882 = vpop.permute.xlu0 %881
  %v884 = vmul.f32 %v860, %v874
  %v885 = vmul.f32 %v861, %v874
  %v886 = vmul.f32 %v862, %v874
  %v887 = vmul.f32 %v863, %v874
  %v888 = vmul.f32 %v864, %v878
  %v889 = vmul.f32 %v865, %v878
  %v890 = vmul.f32 %v866, %v878
  %v891 = vmul.f32 %v867, %v878
  %v892 = vmul.f32 %v868, %v882
  %v893 = vmul.f32 %v869, %v882
  %v894 = vmul.f32 %v870, %v882
  %v895 = vmul.f32 %v871, %v882
  %v896 = vadd.f32 %v795, %v884
  %v897 = vadd.f32 %v796, %v885
  %v898 = vadd.f32 %v797, %v886
  %v899 = vadd.f32 %v798, %v887
  %v900 = vadd.f32 %v799, %v888
  %v901 = vadd.f32 %v800, %v889
  %v902 = vadd.f32 %v801, %v890
  %v903 = vadd.f32 %v802, %v891
  %v904 = vadd.f32 %v803, %v892
  %v905 = vadd.f32 %v804, %v893
  %v906 = vadd.f32 %v805, %v894
  %v907 = vadd.f32 %v806, %v895
  %908 = vrot.lane.b32.xlu0 %v250, 112
  %v909 = vpop.permute.xlu0 %908
  %910 = vrot.lane.b32.xlu0 %v254, 112
  %v911 = vpop.permute.xlu0 %910
  %912 = vrot.lane.b32.xlu0 %v258, 112
  %v913 = vpop.permute.xlu0 %912
  %914 = vrot.lane.b32.xlu0 %v251, 112
  %v915 = vpop.permute.xlu0 %914
  %916 = vrot.lane.b32.xlu0 %v255, 112
  %v917 = vpop.permute.xlu0 %916
  %918 = vrot.lane.b32.xlu0 %v259, 112
  %v919 = vpop.permute.xlu0 %918
  %920 = vrot.lane.b32.xlu0 %v252, 112
  %v921 = vpop.permute.xlu0 %920
  %922 = vrot.lane.b32.xlu0 %v256, 112
  %v923 = vpop.permute.xlu0 %922
  %924 = vrot.lane.b32.xlu0 %v260, 112
  %v925 = vpop.permute.xlu0 %924
  %926 = vrot.lane.b32.xlu0 %v253, 112
  %v927 = vpop.permute.xlu0 %926
  %928 = vrot.lane.b32.xlu0 %v257, 112
  %v929 = vpop.permute.xlu0 %928
  %930 = vrot.lane.b32.xlu0 %v261, 112
  %v931 = vpop.permute.xlu0 %930
  %vm932 = vcmp.lt.s32.totalorder %v325, 112
  %v933 = vsel %vm932, %v921, %v927
  %v934 = vsel %vm932, %v923, %v929
  %v935 = vsel %vm932, %v925, %v931
  %v936 = vsel %vm932, %v915, %v921
  %v937 = vsel %vm932, %v917, %v923
  %v938 = vsel %vm932, %v919, %v925
  %v939 = vsel %vm932, %v909, %v915
  %v940 = vsel %vm932, %v911, %v917
  %v941 = vsel %vm932, %v913, %v919
  %v942 = vsel %vm932, %v927, %v909
  %v943 = vsel %vm932, %v929, %v911
  %v944 = vsel %vm932, %v931, %v913
  %v945 = vlaneseq
  %v946 = vshrl.u32 %v945, 7
  %v947 = vsub.s32 7, %v946
  %v948 = vrot.slane %v265, %v947
  %v949 = vlaneseq
  %v950 = vshrl.u32 %v949, 7
  %v951 = vsub.s32 7, %v950
  %v952 = vrot.slane %v266, %v951
  %v953 = vlaneseq
  %v954 = vshrl.u32 %v953, 7
  %v955 = vsub.s32 7, %v954
  %v956 = vrot.slane %v267, %v955
  %v957 = vlaneseq
  %v958 = vshrl.u32 %v957, 7
  %v959 = vsub.s32 7, %v958
  %v960 = vrot.slane %v268, %v959
  %v961 = vmul.f32 %v939, %v948
  %v962 = vmul.f32 %v936, %v952
  %v963 = vmul.f32 %v933, %v956
  %v964 = vmul.f32 %v942, %v960
  %v965 = vmul.f32 %v940, %v948
  %v966 = vmul.f32 %v937, %v952
  %v967 = vmul.f32 %v934, %v956
  %v968 = vmul.f32 %v943, %v960
  %v969 = vmul.f32 %v941, %v948
  %v970 = vmul.f32 %v938, %v952
  %v971 = vmul.f32 %v935, %v956
  %v972 = vmul.f32 %v944, %v960
  %973 = vset.pattern.permute.xlu0 7
  %974 = vperm.xlu0 %973, %v262
  %v975 = vpop.permute.xlu0 %974
  %977 = vset.pattern.permute.xlu0 7
  %978 = vperm.xlu0 %977, %v263
  %v979 = vpop.permute.xlu0 %978
  %981 = vset.pattern.permute.xlu0 7
  %982 = vperm.xlu0 %981, %v264
  %v983 = vpop.permute.xlu0 %982
  %v985 = vmul.f32 %v961, %v975
  %v986 = vmul.f32 %v962, %v975
  %v987 = vmul.f32 %v963, %v975
  %v988 = vmul.f32 %v964, %v975
  %v989 = vmul.f32 %v965, %v979
  %v990 = vmul.f32 %v966, %v979
  %v991 = vmul.f32 %v967, %v979
  %v992 = vmul.f32 %v968, %v979
  %v993 = vmul.f32 %v969, %v983
  %v994 = vmul.f32 %v970, %v983
  %v995 = vmul.f32 %v971, %v983
  %v996 = vmul.f32 %v972, %v983
  %v997 = vadd.f32 %v896, %v985
  %v998 = vadd.f32 %v897, %v986
  %v999 = vadd.f32 %v898, %v987
  %v1000 = vadd.f32 %v899, %v988
  %v1001 = vadd.f32 %v900, %v989
  %v1002 = vadd.f32 %v901, %v990
  %v1003 = vadd.f32 %v902, %v991
  %v1004 = vadd.f32 %v903, %v992
  %v1005 = vadd.f32 %v904, %v993
  %v1006 = vadd.f32 %v905, %v994
  %v1007 = vadd.f32 %v906, %v995
  %v1008 = vadd.f32 %v907, %v996
  %1009 = vrot.lane.b32.xlu0 %v250, 111
  %v1010 = vpop.permute.xlu0 %1009
  %1011 = vrot.lane.b32.xlu0 %v254, 111
  %v1012 = vpop.permute.xlu0 %1011
  %1013 = vrot.lane.b32.xlu0 %v258, 111
  %v1014 = vpop.permute.xlu0 %1013
  %1015 = vrot.lane.b32.xlu0 %v251, 111
  %v1016 = vpop.permute.xlu0 %1015
  %1017 = vrot.lane.b32.xlu0 %v255, 111
  %v1018 = vpop.permute.xlu0 %1017
  %1019 = vrot.lane.b32.xlu0 %v259, 111
  %v1020 = vpop.permute.xlu0 %1019
  %1021 = vrot.lane.b32.xlu0 %v252, 111
  %v1022 = vpop.permute.xlu0 %1021
  %1023 = vrot.lane.b32.xlu0 %v256, 111
  %v1024 = vpop.permute.xlu0 %1023
  %1025 = vrot.lane.b32.xlu0 %v260, 111
  %v1026 = vpop.permute.xlu0 %1025
  %1027 = vrot.lane.b32.xlu0 %v253, 111
  %v1028 = vpop.permute.xlu0 %1027
  %1029 = vrot.lane.b32.xlu0 %v257, 111
  %v1030 = vpop.permute.xlu0 %1029
  %1031 = vrot.lane.b32.xlu0 %v261, 111
  %v1032 = vpop.permute.xlu0 %1031
  %vm1033 = vcmp.lt.s32.totalorder %v325, 111
  %v1034 = vsel %vm1033, %v1022, %v1028
  %v1035 = vsel %vm1033, %v1024, %v1030
  %v1036 = vsel %vm1033, %v1026, %v1032
  %v1037 = vsel %vm1033, %v1016, %v1022
  %v1038 = vsel %vm1033, %v1018, %v1024
  %v1039 = vsel %vm1033, %v1020, %v1026
  %v1040 = vsel %vm1033, %v1010, %v1016
  %v1041 = vsel %vm1033, %v1012, %v1018
  %v1042 = vsel %vm1033, %v1014, %v1020
  %v1043 = vsel %vm1033, %v1028, %v1010
  %v1044 = vsel %vm1033, %v1030, %v1012
  %v1045 = vsel %vm1033, %v1032, %v1014
  %v1046 = vlaneseq
  %v1047 = vshrl.u32 %v1046, 7
  %v1048 = vsub.s32 0, %v1047
  %v1049 = vrot.slane %v269, %v1048
  %v1050 = vlaneseq
  %v1051 = vshrl.u32 %v1050, 7
  %v1052 = vsub.s32 0, %v1051
  %v1053 = vrot.slane %v270, %v1052
  %v1054 = vlaneseq
  %v1055 = vshrl.u32 %v1054, 7
  %v1056 = vsub.s32 0, %v1055
  %v1057 = vrot.slane %v271, %v1056
  %v1058 = vlaneseq
  %v1059 = vshrl.u32 %v1058, 7
  %v1060 = vsub.s32 0, %v1059
  %v1061 = vrot.slane %v272, %v1060
  %v1062 = vmul.f32 %v1040, %v1049
  %v1063 = vmul.f32 %v1037, %v1053
  %v1064 = vmul.f32 %v1034, %v1057
  %v1065 = vmul.f32 %v1043, %v1061
  %v1066 = vmul.f32 %v1041, %v1049
  %v1067 = vmul.f32 %v1038, %v1053
  %v1068 = vmul.f32 %v1035, %v1057
  %v1069 = vmul.f32 %v1044, %v1061
  %v1070 = vmul.f32 %v1042, %v1049
  %v1071 = vmul.f32 %v1039, %v1053
  %v1072 = vmul.f32 %v1036, %v1057
  %v1073 = vmul.f32 %v1045, %v1061
  %1074 = vset.pattern.permute.xlu0 8
  %1075 = vperm.xlu0 %1074, %v262
  %v1076 = vpop.permute.xlu0 %1075
  %1078 = vset.pattern.permute.xlu0 8
  %1079 = vperm.xlu0 %1078, %v263
  %v1080 = vpop.permute.xlu0 %1079
  %1082 = vset.pattern.permute.xlu0 8
  %1083 = vperm.xlu0 %1082, %v264
  %v1084 = vpop.permute.xlu0 %1083
  %v1086 = vmul.f32 %v1062, %v1076
  %v1087 = vmul.f32 %v1063, %v1076
  %v1088 = vmul.f32 %v1064, %v1076
  %v1089 = vmul.f32 %v1065, %v1076
  %v1090 = vmul.f32 %v1066, %v1080
  %v1091 = vmul.f32 %v1067, %v1080
  %v1092 = vmul.f32 %v1068, %v1080
  %v1093 = vmul.f32 %v1069, %v1080
  %v1094 = vmul.f32 %v1070, %v1084
  %v1095 = vmul.f32 %v1071, %v1084
  %v1096 = vmul.f32 %v1072, %v1084
  %v1097 = vmul.f32 %v1073, %v1084
  %v1098 = vadd.f32 %v997, %v1086
  %v1099 = vadd.f32 %v998, %v1087
  %v1100 = vadd.f32 %v999, %v1088
  %v1101 = vadd.f32 %v1000, %v1089
  %v1102 = vadd.f32 %v1001, %v1090
  %v1103 = vadd.f32 %v1002, %v1091
  %v1104 = vadd.f32 %v1003, %v1092
  %v1105 = vadd.f32 %v1004, %v1093
  %v1106 = vadd.f32 %v1005, %v1094
  %v1107 = vadd.f32 %v1006, %v1095
  %v1108 = vadd.f32 %v1007, %v1096
  %v1109 = vadd.f32 %v1008, %v1097
  %1110 = vset.pattern.permute.xlu0 1
  %1111 = vperm.xlu0 %1110, %v28
  %v1112 = vpop.permute.xlu0 %1111
  %1114 = vset.pattern.permute.xlu0 1
  %1115 = vperm.xlu0 %1114, %v29
  %v1116 = vpop.permute.xlu0 %1115
  %1118 = vset.pattern.permute.xlu0 1
  %1119 = vperm.xlu0 %1118, %v30
  %v1120 = vpop.permute.xlu0 %1119
  %v1122 = vadd.f32 %v1098, %v1112
  %v1123 = vadd.f32 %v1099, %v1112
  %v1124 = vadd.f32 %v1100, %v1112
  %v1125 = vadd.f32 %v1101, %v1112
  %v1126 = vadd.f32 %v1102, %v1116
  %v1127 = vadd.f32 %v1103, %v1116
  %v1128 = vadd.f32 %v1104, %v1116
  %v1129 = vadd.f32 %v1105, %v1116
  %v1130 = vadd.f32 %v1106, %v1120
  %v1131 = vadd.f32 %v1107, %v1120
  %v1132 = vadd.f32 %v1108, %v1120
  %v1133 = vadd.f32 %v1109, %v1120
  %v1134 = vmax.f32 %v1122, 0.0
  %v1135 = vmax.f32 %v1123, 0.0
  %v1136 = vmax.f32 %v1124, 0.0
  %v1137 = vmax.f32 %v1125, 0.0
  %v1138 = vmax.f32 %v1126, 0.0
  %v1139 = vmax.f32 %v1127, 0.0
  %v1140 = vmax.f32 %v1128, 0.0
  %v1141 = vmax.f32 %v1129, 0.0
  %v1142 = vmax.f32 %v1130, 0.0
  %v1143 = vmax.f32 %v1131, 0.0
  %v1144 = vmax.f32 %v1132, 0.0
  %v1145 = vmax.f32 %v1133, 0.0
  %v1146 = vmin.f32 %v1134, 6.0
  %v1147 = vmin.f32 %v1135, 6.0
  %v1148 = vmin.f32 %v1136, 6.0
  %v1149 = vmin.f32 %v1137, 6.0
  %v1150 = vmin.f32 %v1138, 6.0
  %v1151 = vmin.f32 %v1139, 6.0
  %v1152 = vmin.f32 %v1140, 6.0
  %v1153 = vmin.f32 %v1141, 6.0
  %v1154 = vmin.f32 %v1142, 6.0
  %v1155 = vmin.f32 %v1143, 6.0
  %v1156 = vmin.f32 %v1144, 6.0
  %v1157 = vmin.f32 %v1145, 6.0
  %v1158 = vld [vmem:[%s3] sm:$0xf]
  %v1159 = vld [vmem:[%s5] sm:$0xf]
  %1161 = vset.pattern.permute.xlu0 0
  %1162 = vperm.xlu0 %1161, %v1159
  %v1163 = vpop.permute.xlu0 %1162
  %vm1165 = vcmask 195584
  %v1167 = vsel %vm1165, %v1158, 0
  %1169 = vmatprep.subr.mxu0 0.0
  %1170 = vmatpush1.msra.mxu0 0.0
  %1171 = vmatprep.subr.mxu0 0.0
  %1172 = vmatpush1.msra.mxu0 0.0
  %1173 = vmatprep.subr.mxu0 0.0
  %1174 = vmatpush1.msra.mxu0 0.0
  %1175 = vmatprep.subr.mxu0 0.0
  %1176 = vmatpush1.msra.mxu0 0.0
  %1177 = vmatprep.subr.mxu0 0.0
  %1178 = vmatpush1.msra.mxu0 0.0
  %1179 = vmatprep.subr.mxu0 0.0
  %1180 = vmatpush1.msra.mxu0 0.0
  %1181 = vmatprep.subr.mxu0 0.0
  %1182 = vmatpush1.msra.mxu0 0.0
  %1183 = vmatprep.subr.mxu0 0.0
  %1184 = vmatpush1.msra.mxu0 0.0
  %1185 = vmatprep.subr.mxu0 0.0
  %1186 = vmatpush1.msra.mxu0 0.0
  %1187 = vmatprep.subr.mxu0 0.0
  %1188 = vmatpush1.msra.mxu0 0.0
  %1189 = vmatprep.subr.mxu0 0.0
  %1190 = vmatpush1.msra.mxu0 0.0
  %1191 = vmatprep.subr.mxu0 0.0
  %1192 = vmatpush1.msra.mxu0 0.0
  %1193 = vmatprep.subr.mxu0 0.0
  %1194 = vmatpush1.msra.mxu0 0.0
  %1195 = vmatprep.subr.mxu0 %v1155
  %1196 = vmatpush1.msra.mxu0 %v1154
  %1197 = vmatprep.subr.mxu0 %v1151
  %1198 = vmatpush1.msra.mxu0 %v1150
  %1199 = vmatprep.subr.mxu0 %v1147
  %1200 = vmatpush1.msra.mxu0 %v1146
  %1201 = vmatprep.subr.mxu0 0.0
  %1202 = vmatpush2.msra.mxu0 0.0
  %1203 = vmatprep.subr.mxu0 0.0
  %1204 = vmatpush2.msra.mxu0 0.0
  %1205 = vmatprep.subr.mxu0 0.0
  %1206 = vmatpush2.msra.mxu0 0.0
  %1207 = vmatprep.subr.mxu0 0.0
  %1208 = vmatpush2.msra.mxu0 0.0
  %1209 = vmatprep.subr.mxu0 0.0
  %1210 = vmatpush2.msra.mxu0 0.0
  %1211 = vmatprep.subr.mxu0 0.0
  %1212 = vmatpush2.msra.mxu0 0.0
  %1213 = vmatprep.subr.mxu0 0.0
  %1214 = vmatpush2.msra.mxu0 0.0
  %1215 = vmatprep.subr.mxu0 0.0
  %1216 = vmatpush2.msra.mxu0 0.0
  %1217 = vmatprep.subr.mxu0 0.0
  %1218 = vmatpush2.msra.mxu0 0.0
  %1219 = vmatprep.subr.mxu0 0.0
  %1220 = vmatpush2.msra.mxu0 0.0
  %1221 = vmatprep.subr.mxu0 0.0
  %1222 = vmatpush2.msra.mxu0 0.0
  %1223 = vmatprep.subr.mxu0 0.0
  %1224 = vmatpush2.msra.mxu0 0.0
  %1225 = vmatprep.subr.mxu0 0.0
  %1226 = vmatpush2.msra.mxu0 0.0
  %1227 = vmatprep.subr.mxu0 0.0
  %1228 = vmatpush2.msra.mxu0 0.0
  %1229 = vmatprep.subr.mxu0 0.0
  %1230 = vmatpush2.msra.mxu0 0.0
  %1231 = vmatprep.subr.mxu0 0.0
  %1232 = vmatpush2.msra.mxu0 0.0
  %1233 = vmatprep.mubr.f32.mxu0 0.0
  %1234 = vmatmul.mubr.f32.gmra.mxu0 %v1167
  %v1235 = vpop.f32.mrf.mxu0
  %v1236 = vadd.f32 %v1163, %v1235
  %v1237 = vpop.f32.mrf.mxu0
  %v1238 = vadd.f32 %v1163, %v1237
  %1239 = vdwg.mxu0
  %1240 = vmatprep.subr.mxu0 0.0
  %1241 = vmatpush1.msra.mxu0 0.0
  %1242 = vmatprep.subr.mxu0 0.0
  %1243 = vmatpush1.msra.mxu0 0.0
  %1244 = vmatprep.subr.mxu0 0.0
  %1245 = vmatpush1.msra.mxu0 0.0
  %1246 = vmatprep.subr.mxu0 0.0
  %1247 = vmatpush1.msra.mxu0 0.0
  %1248 = vmatprep.subr.mxu0 0.0
  %1249 = vmatpush1.msra.mxu0 0.0
  %1250 = vmatprep.subr.mxu0 0.0
  %1251 = vmatpush1.msra.mxu0 0.0
  %1252 = vmatprep.subr.mxu0 0.0
  %1253 = vmatpush1.msra.mxu0 0.0
  %1254 = vmatprep.subr.mxu0 0.0
  %1255 = vmatpush1.msra.mxu0 0.0
  %1256 = vmatprep.subr.mxu0 0.0
  %1257 = vmatpush1.msra.mxu0 0.0
  %1258 = vmatprep.subr.mxu0 0.0
  %1259 = vmatpush1.msra.mxu0 0.0
  %1260 = vmatprep.subr.mxu0 0.0
  %1261 = vmatpush1.msra.mxu0 0.0
  %1262 = vmatprep.subr.mxu0 0.0
  %1263 = vmatpush1.msra.mxu0 0.0
  %1264 = vmatprep.subr.mxu0 0.0
  %1265 = vmatpush1.msra.mxu0 0.0
  %1266 = vmatprep.subr.mxu0 %v1157
  %1267 = vmatpush1.msra.mxu0 %v1156
  %1268 = vmatprep.subr.mxu0 %v1153
  %1269 = vmatpush1.msra.mxu0 %v1152
  %1270 = vmatprep.subr.mxu0 %v1149
  %1271 = vmatpush1.msra.mxu0 %v1148
  %1272 = vmatprep.subr.mxu0 0.0
  %1273 = vmatpush2.msra.mxu0 0.0
  %1274 = vmatprep.subr.mxu0 0.0
  %1275 = vmatpush2.msra.mxu0 0.0
  %1276 = vmatprep.subr.mxu0 0.0
  %1277 = vmatpush2.msra.mxu0 0.0
  %1278 = vmatprep.subr.mxu0 0.0
  %1279 = vmatpush2.msra.mxu0 0.0
  %1280 = vmatprep.subr.mxu0 0.0
  %1281 = vmatpush2.msra.mxu0 0.0
  %1282 = vmatprep.subr.mxu0 0.0
  %1283 = vmatpush2.msra.mxu0 0.0
  %1284 = vmatprep.subr.mxu0 0.0
  %1285 = vmatpush2.msra.mxu0 0.0
  %1286 = vmatprep.subr.mxu0 0.0
  %1287 = vmatpush2.msra.mxu0 0.0
  %1288 = vmatprep.subr.mxu0 0.0
  %1289 = vmatpush2.msra.mxu0 0.0
  %1290 = vmatprep.subr.mxu0 0.0
  %1291 = vmatpush2.msra.mxu0 0.0
  %1292 = vmatprep.subr.mxu0 0.0
  %1293 = vmatpush2.msra.mxu0 0.0
  %1294 = vmatprep.subr.mxu0 0.0
  %1295 = vmatpush2.msra.mxu0 0.0
  %1296 = vmatprep.subr.mxu0 0.0
  %1297 = vmatpush2.msra.mxu0 0.0
  %1298 = vmatprep.subr.mxu0 0.0
  %1299 = vmatpush2.msra.mxu0 0.0
  %1300 = vmatprep.subr.mxu0 0.0
  %1301 = vmatpush2.msra.mxu0 0.0
  %1302 = vmatprep.subr.mxu0 0.0
  %1303 = vmatpush2.msra.mxu0 0.0
  %1304 = vmatprep.mubr.f32.mxu0 0.0
  %1305 = vmatmul.mubr.f32.gmra.mxu0 %v1167
  %v1306 = vpop.f32.mrf.mxu0
  %v1307 = vadd.f32 %v1163, %v1306
  %v1308 = vpop.f32.mrf.mxu0
  %v1309 = vadd.f32 %v1163, %v1308
  %1310 = vdwg.mxu0
  %v1313 = vadd.f32 %v1236, %v26
  %v1314 = vadd.f32 %v1238, %v51
  %v1315 = vadd.f32 %v1307, %v27
  %v1316 = vadd.f32 %v1309, %v52
  %v1321 = vcombine.low %v1313, %v1314
  %v1322 = vcombine.low %v1315, %v1316
  %1325 = vst [vmem:[%s7] sm:$0xff] %v1321
  %1326 = vst [vmem:[%s7 + $0x8] sm:$0xff] %v1322
  // Predicated region
  $region30: #{base_block_forward.1} parent=0 // pred_check
    _
  $region31: #{base_block_forward.1} parent=0 // pred_check_branch
    %1328 = sbr.rel (0) target = $region33
  $region32: #{base_block_forward.1} parent=0 // pred_region
    _
  $region33: #{base_block_forward.1} parent=0 // pred_fallthru
    _
  // Predicated region
  $region34: #{base_block_forward.1} parent=0 // pred_check
    _
  $region35: #{base_block_forward.1} parent=0 // pred_check_branch
    %1330 = sbr.rel (0) target = $region37
  $region36: #{base_block_forward.1} parent=0 // pred_region
    _
  $region37: #{base_block_forward.1} parent=0 // pred_fallthru
    _

</llo_original>
